<compile_context>
chip_gen: v6e
topology: v6e:2x2x1
jax: 0.10.0
libtpu: 0.0.40
codegen_flags: <defaults>
</compile_context>

<pallas_src>
import math

import jax
import jax.numpy as jnp
from jax.experimental import pallas as pl
from jax.experimental.pallas import tpu as pltpu


def _min_fixed_noise(dtype):
    """gpytorch settings.min_fixed_noise, dtype-dependent."""
    dt = jnp.dtype(dtype)
    if dt == jnp.dtype(jnp.float64):
        return 1e-6
    if dt in (jnp.dtype(jnp.float16), jnp.dtype(jnp.bfloat16)):
        return 1e-3
    return 1e-4  # float32


def _pick_tile_rows(n, itemsize):
    """Largest row tile in {1024,512,256,128} dividing n with <= ~8 MiB/block."""
    budget = 8 * 1024 * 1024
    max_rows = max(128, (budget // (n * itemsize)) // 128 * 128)
    for cand in (1024, 512, 256, 128):
        if cand <= max_rows and cand <= n and n % cand == 0:
            return cand
    return 128  # n % 128 == 0 is a precondition of the Pallas path


def _diag_embed_kernel(noise_ref, out_ref):
    # noise_ref: (1, 1, N)  -- full lane-aligned noise row for this batch element
    # out_ref:   (1, TILE_R, N) rows [r0, r0+TILE_R) of the (N, N) matrix
    _, tile_r, n = out_ref.shape
    r0 = pl.program_id(1) * tile_r
    row = jax.lax.broadcasted_iota(jnp.int32, (tile_r, n), 0) + r0   # global row idx
    col = jax.lax.broadcasted_iota(jnp.int32, (tile_r, n), 1)        # global col idx
    mask = (row == col)[None, :, :]                                  # (1, TILE_R, N)
    noise = noise_ref[...]                                           # (1, 1, N)
    # On the diagonal col == global row, so noise[..., col] is the diagonal value;
    # keeping noise indexed by the lane (column) axis avoids any cross-lane moves.
    out_ref[...] = jnp.where(mask, noise, jnp.zeros((), dtype=noise.dtype))


def diag_embed_pallas(noise):
    """noise: (..., N) -> (..., N, N) diagonal matrices."""
    *batch, n = noise.shape
    dtype = noise.dtype

    # Small / non-lane-aligned N: masked partial stores (vst.msk) + pallas_call
    # overhead dwarf the work; let XLA fuse the broadcast instead.
    if n < 128 or n % 128 != 0:
        eye = jnp.eye(n, dtype=jnp.bool_)
        return jnp.where(eye, noise[..., :, None], jnp.zeros((), dtype=dtype))

    b = math.prod(batch) if batch else 1
    noise3d = noise.reshape(b, 1, n)

    itemsize = jnp.dtype(dtype).itemsize
    tile_r = _pick_tile_rows(n, itemsize)
    grid = (b, n // tile_r)

    out_block_bytes = tile_r * n * itemsize
    in_block_bytes = 8 * n * itemsize  # (1, 1, N) block pads to 8 sublanes in VMEM
    vmem_limit = int(
        min(64 << 20, max(16 << 20, 2 * (out_block_bytes + in_block_bytes) + (2 << 20)))
    )

    out = pl.pallas_call(
        _diag_embed_kernel,
        out_shape=jax.ShapeDtypeStruct((b, n, n), dtype),
        grid=grid,
        in_specs=[pl.BlockSpec((1, 1, n), lambda bi, ri: (bi, 0, 0))],
        out_specs=pl.BlockSpec((1, tile_r, n), lambda bi, ri: (bi, ri, 0)),
        compiler_params=pltpu.CompilerParams(
            dimension_semantics=("parallel", "parallel"),
            vmem_limit_bytes=vmem_limit,
        ),
        cost_estimate=pl.CostEstimate(
            flops=0,
            transcendentals=0,
            bytes_accessed=int(b * n * n * itemsize + b * n * itemsize),
        ),
    )(noise3d)
    return out.reshape(*batch, n, n)


class FixedGaussianNoise:
    """JAX/Pallas port of gpytorch's FixedGaussianNoise."""

    def __init__(self, noise):
        # clamp_min(min_fixed_noise) — warning emission omitted.
        min_noise = _min_fixed_noise(noise.dtype)
        self.noise = jnp.maximum(noise, jnp.asarray(min_noise, noise.dtype))

    def __call__(self, *params, shape=None, noise=None):
        if shape is None:
            p = params[0] if not isinstance(params[0], (tuple, list)) else params[0][0]
            shape = p.shape if len(p.shape) == 1 else p.shape[:-1]
        if noise is not None:
            return diag_embed_pallas(noise)
        elif shape[-1] == self.noise.shape[-1]:
            return diag_embed_pallas(self.noise)
        else:
            raise RuntimeError(
                f"The shape of the noise ({self.noise.shape}) does not match "
                f"the shape of the input ({shape})."
            )


if __name__ == "__main__":
    key = jax.random.PRNGKey(0)
    k_noise, k_x, k_override, k_big = jax.random.split(key, 4)

    # ---- Small-N paths (N=16): plain-JAX fallback, matches module semantics ----
    N, D = 16, 4
    fixed_noise = jax.random.uniform(
        k_noise, (N,), dtype=jnp.float32, minval=1e-6, maxval=0.5
    )
    x = jax.random.normal(k_x, (N, D), dtype=jnp.float32)  # GP inputs

    model = FixedGaussianNoise(fixed_noise)

    # Path 1: shape inferred from params[0] -> diag_embed(self.noise)
    cov = jax.block_until_ready(model(x))
    clamped = jnp.maximum(fixed_noise, _min_fixed_noise(jnp.float32))
    ref = jnp.where(jnp.eye(N, dtype=bool), clamped[:, None], 0.0)
    assert cov.shape == (N, N)
    assert jnp.allclose(cov, ref, atol=1e-6), "diag_embed(self.noise) mismatch"

    # Path 2: explicit noise override (batched) -> diag_embed(noise)
    noise_override = jax.random.uniform(
        k_override, (2, N), dtype=jnp.float32, minval=0.01, maxval=1.0
    )
    cov_b = jax.block_until_ready(model(x, noise=noise_override))
    ref_b = jnp.where(jnp.eye(N, dtype=bool), noise_override[:, :, None], 0.0)
    assert cov_b.shape == (2, N, N)
    assert jnp.allclose(cov_b, ref_b, atol=1e-6), "diag_embed(noise) mismatch"

    # ---- Lane-aligned path (N=256, batch=2): exercises the Pallas kernel ----
    NB, NL = 2, 256
    big_noise = jax.random.uniform(
        k_big, (NB, NL), dtype=jnp.float32, minval=0.01, maxval=1.0
    )
    cov_big = jax.block_until_ready(model(x, noise=big_noise))
    ref_big = jnp.where(jnp.eye(NL, dtype=bool), big_noise[:, :, None], 0.0)
    assert cov_big.shape == (NB, NL, NL)
    assert jnp.allclose(cov_big, ref_big, atol=1e-6), "Pallas diag_embed mismatch"

    print("KERNEL_OK")
</pallas_src>

<mosaic_0001>
module attributes {stable_mosaic.version = 11 : i64} {
  func.func @_diag_embed_kernel(%arg0: i32, %arg1: i32, %arg2: memref<1x1x256xf32, #tpu.memory_space<vmem>>, %arg3: memref<1x256x256xf32, #tpu.memory_space<vmem>>) attributes {dimension_semantics = [#tpu.dimension_semantics<parallel>, #tpu.dimension_semantics<parallel>], iteration_bounds = array<i64: 2, 1>, scalar_prefetch = 0 : i64, scratch_operands = 0 : i64, tpu.core_type = #tpu.core_type<tc>, window_params = [{transform_indices = @transform_0, window_bounds = array<i64: 1, 1, 256>}, {transform_indices = @transform_1, window_bounds = array<i64: 1, 256, 256>}]} {
    %c256_i32 = arith.constant 256 : i32
    %0 = arith.muli %arg1, %c256_i32 : i32
    %1 = tpu.iota {dimensions = array<i32: 0>} : vector<256x256xi32>
    %2 = vector.broadcast %0 : i32 to vector<256x256xi32>
    %3 = arith.addi %1, %2 : vector<256x256xi32>
    %4 = tpu.iota {dimensions = array<i32: 1>} : vector<256x256xi32>
    %5 = arith.cmpi eq, %3, %4 : vector<256x256xi32>
    %6 = vector.shape_cast %5 : vector<256x256xi1> to vector<1x256x256xi1>
    %c0 = arith.constant 0 : index
    %c0_0 = arith.constant 0 : index
    %c0_1 = arith.constant 0 : index
    %7 = vector.load %arg2[%c0, %c0_0, %c0_1] : memref<1x1x256xf32, #tpu.memory_space<vmem>>, vector<1x1x256xf32>
    %cst = arith.constant 0.000000e+00 : f32
    %8 = vector.shape_cast %7 : vector<1x1x256xf32> to vector<1x1x256xf32>
    %9 = vector.broadcast %8 : vector<1x1x256xf32> to vector<1x256x256xf32>
    %10 = vector.broadcast %cst : f32 to vector<1x256x256xf32>
    %11 = arith.select %6, %9, %10 : vector<1x256x256xi1>, vector<1x256x256xf32>
    %c0_2 = arith.constant 0 : index
    %c0_3 = arith.constant 0 : index
    %c0_4 = arith.constant 0 : index
    %12 = vector.load %arg3[%c0_2, %c0_3, %c0_4] : memref<1x256x256xf32, #tpu.memory_space<vmem>>, vector<1x256x256xf32>
    tpu.vector_store %arg3[%c0_2, %c0_3, %c0_4], %11 {strides = array<i32>} : memref<1x256x256xf32, #tpu.memory_space<vmem>>, vector<1x256x256xf32>,
    return
  }
  func.func @transform_0(%arg0: i32, %arg1: i32) -> (i32, i32, i32) {
    %c0_i32 = arith.constant 0 : i32
    %c0_i32_0 = arith.constant 0 : i32
    %c0_i32_1 = arith.constant 0 : i32
    return %arg0, %c0_i32, %c0_i32_0 : i32, i32, i32
  }
  func.func @transform_1(%arg0: i32, %arg1: i32) -> (i32, i32, i32) {
    %c0_i32 = arith.constant 0 : i32
    %c0_i32_0 = arith.constant 0 : i32
    return %arg0, %arg1, %c0_i32 : i32, i32, i32
  }
}

</mosaic_0001>

<llo_original>
// kernel: tpu_custom_call.1
$region0: #{tpu_custom_call.1}
  #allocation0 [shape = 'u32[]', space=smem, size = 0x4, offset = 0x4, fixed_abs, tag = 'smem constant byte address 0x4 - core index']
  #allocation1 [shape = 'u32[144,128]{1,0:T(1,128)}', space=vmem, size = 0x12000, scoped, tag = 'internal scratch']
  %s0 = inlined_call_operand.hbm [shape: f32[2,1,256], index: 0, kind: input, shape index: {}]
  %s1 = inlined_call_operand.hbm [shape: f32[2,256,256], index: 1, kind: output, shape index: {}]
  %s2 = sld [smem:[#allocation0]]
  $region41: #{tpu_custom_call.1} parent=0
    _
  %s4 = ssub.s32 1, %s2
  %s5 = scalar_select 0, %s4, %s2
  $region1: #{tpu_custom_call.1} parent=0
    #allocation2 [shape = 'u8[2048]{0}', space=vmem, size = 0x800, scoped, tag = 'input window, operand 0']
    #allocation3 [shape = 's32[2]{0}', space=sflag, size = 0x8, scoped, tag = 'scoped memory for tpu_custom_call.1']
    #allocation4 [shape = 's32[2]{0}', space=sflag, size = 0x8, scoped, tag = 'scoped memory for tpu_custom_call.1']
    #allocation5 [shape = 'u8[524288]{0}', space=vmem, size = 0x80000, scoped, tag = 'output window, operand 0']
    %6 = vsyncpa [#allocation3], 0
    %s7 = scalar_lea.sflag [#allocation3], 1
    %8 = vsyncpa %s7, 0
    %9 = vsyncpa [#allocation4], 0
    %s10 = scalar_lea.sflag [#allocation4], 1
    %11 = vsyncpa %s10, 0
    loop: start=0, step=1, limit=4
    $region2: #{tpu_custom_call.1} parent=1 // loop_pre_header
      _
    $region3: #{tpu_custom_call.1} parent=1 // loop_header
      %s13 = sphi 0, %s17
      %p14 = scmp.ge.s32.totalorder %s13, 4
      %s20 = sphi 0, %s32
      %s21 = sphi 0, %s28
      %s22 = sphi 0, %s20
      %s23 = sphi 0, %s21
      %s24 = sphi 0, %s22
      %s25 = sphi 0, %s23
      %s35 = sphi 0, %s37
      %s38 = sphi 0, %s35
      %s39 = sphi 0, %s38
      %s55 = sphi 0, %s39
      %s63 = sphi 0, %s65
      %s66 = sphi 0, %s63
      %s67 = sphi 0, %s66
      %s83 = sphi 0, %s67
    $region4: #{tpu_custom_call.1} parent=1 // loop_header_branch
      %16 = sbr.rel (%p14) target = $region8
    $region5: #{tpu_custom_call.1} parent=1 // loop_body
      %s18 = ssub.s32 %s13, 1
      %s19 = ssub.s32 %s13, 2
      %s26 = sadd.s32 1, %s21
      %p27 = scmp.ge.s32.totalorder %s26, 1
      %s28 = scalar_select %p27, 0, %s26
      %s29 = sadd.s32 1, %s20
      %s30 = scalar_select %p27, %s29, %s20
      %p31 = scmp.ge.s32.totalorder %s30, 2
      %s32 = scalar_select %p31, 0, %s30
      %s33 = ssub.s32 %s20, %s32
      %p34 = scmp.eq.s32.totalorder %s33, 0
      %s36 = sadd.s32 %s35, 1
      %s37 = scalar_select %p34, %s35, %s36
      %p40 = pneg %p34
      %p41 = scmp.eq.s32.totalorder %s13, 1
      %p42 = por %p40, %p41
      %p43 = scmp.ne.s32.totalorder %s35, %s38
      %p44 = scmp.eq.s32.totalorder %s13, 0
      %p45 = por %p43, %p44
      %p46 = scmp.ne.s32.totalorder %s35, %s38
      %p47 = scmp.eq.s32.totalorder %s18, 1
      %p48 = por %p46, %p47
      %p49 = scmp.ne.s32.totalorder %s38, %s39
      %p50 = scmp.eq.s32.totalorder %s18, 0
      %p51 = por %p49, %p50
      %p52 = scmp.ne.s32.totalorder %s38, %s39
      %p53 = scmp.eq.s32.totalorder %s19, 1
      %p54 = por %p52, %p53
      %p56 = scmp.ne.s32.totalorder %s39, %s55
      %p57 = scmp.eq.s32.totalorder %s19, 0
      %p58 = por %p56, %p57
      %s59 = ssub.s32 %s20, %s32
      %s60 = ssub.s32 %s21, %s28
      %s61 = sor.u32 %s59, %s60
      %p62 = scmp.eq.s32.totalorder %s61, 0
      %s64 = sadd.s32 %s63, 1
      %s65 = scalar_select %p62, %s63, %s64
      %p68 = pneg %p62
      %p69 = scmp.eq.s32.totalorder %s13, 1
      %p70 = por %p68, %p69
      %p71 = scmp.ne.s32.totalorder %s63, %s66
      %p72 = scmp.eq.s32.totalorder %s13, 0
      %p73 = por %p71, %p72
      %p74 = scmp.ne.s32.totalorder %s63, %s66
      %p75 = scmp.eq.s32.totalorder %s18, 1
      %p76 = por %p74, %p75
      %p77 = scmp.ne.s32.totalorder %s66, %s67
      %p78 = scmp.eq.s32.totalorder %s18, 0
      %p79 = por %p77, %p78
      %p80 = scmp.ne.s32.totalorder %s66, %s67
      %p81 = scmp.eq.s32.totalorder %s19, 1
      %p82 = por %p80, %p81
      %p84 = scmp.ne.s32.totalorder %s67, %s83
      %p85 = scmp.eq.s32.totalorder %s19, 0
      %p86 = por %p84, %p85
      %p87 = scmp.le.s32.totalorder 1, %s13
      %p88 = scmp.lt.s32.totalorder %s13, 3
      %p89 = pnand %p87, %p88
      %p90 = pneg %p89
      // Predicated region
      $region9: #{tpu_custom_call.1} parent=5 // pred_check
        _
      $region10: #{tpu_custom_call.1} parent=5 // pred_check_branch
        %92 = sbr.rel (%p89) target = $region12
      $region11: #{tpu_custom_call.1} parent=5 // pred_region
        %s93 = ssub.s32 %s13, 1
      $region12: #{tpu_custom_call.1} parent=5 // pred_fallthru
        _
      %p94 = scmp.lt.s32.totalorder %s13, 2
      // Predicated region
      $region13: #{tpu_custom_call.1} parent=5 // pred_check
        %p95 = pneg %p94
      $region14: #{tpu_custom_call.1} parent=5 // pred_check_branch
        %97 = sbr.rel (%p95) target = $region16
      $region15: #{tpu_custom_call.1} parent=5 // pred_region
        // Predicated region
        $region17: #{tpu_custom_call.1} parent=15 // pred_check
          %p98 = pneg %p45
        $region18: #{tpu_custom_call.1} parent=15 // pred_check_branch
          %100 = sbr.rel (%p98) target = $region20
        $region19: #{tpu_custom_call.1} parent=15 // pred_region
          %s101 = sand.u32 %s35, 1
          %s102 = scalar_lea.sflag [#allocation3], %s101
          %s103 = sand.u32 %s35, 1
          %s104 = smul.addr %s103, 2
          %s105 = scalar_lea.vmem [#allocation2], %s104
          %s107 = ssub.s32 32, 32
          %108 = vsyncadd %s102, %s107
          %s109 = smul.addr %s20, 2
          %s110 = smul.addr %s109, 16
          %s111 = scalar_lea.hbm %s0, %s110
          %s113 = sshll.u32 %s105, 4
          %s114 = int_to_ptr.vmem [resolvable:$true] %s113
          %116 = dma.hbm_to_vmem [thread:$0]  %s111, 32, %s114, %s102
        $region20: #{tpu_custom_call.1} parent=15 // pred_fallthru
          _
      $region16: #{tpu_custom_call.1} parent=5 // pred_fallthru
        _
      %p117 = scmp.le.s32.totalorder 1, %s13
      %p118 = scmp.lt.s32.totalorder %s13, 3
      %p119 = pnand %p117, %p118
      %p120 = pneg %p119
      // Predicated region
      $region21: #{tpu_custom_call.1} parent=5 // pred_check
        _
      $region22: #{tpu_custom_call.1} parent=5 // pred_check_branch
        %122 = sbr.rel (%p119) target = $region24
      $region23: #{tpu_custom_call.1} parent=5 // pred_region
        %s123 = ssub.s32 %s13, 1
        %s124 = sand.u32 %s38, 1
        %s125 = scalar_lea.sflag [#allocation3], %s124
        %s126 = sand.u32 %s38, 1
        %s127 = smul.addr %s126, 2
        %s128 = scalar_lea.vmem [#allocation2], %s127
        // Predicated region
        $region25: #{tpu_custom_call.1} parent=23 // pred_check
          %p129 = pneg %p51
        $region26: #{tpu_custom_call.1} parent=23 // pred_check_branch
          %131 = sbr.rel (%p129) target = $region28
        $region27: #{tpu_custom_call.1} parent=23 // pred_region
          %132 = dma.done %s125, 32
        $region28: #{tpu_custom_call.1} parent=23 // pred_fallthru
          _
        %s133 = sand.u32 %s38, 1
        %s134 = scalar_lea.sflag [#allocation3], %s133
        %s135 = sand.u32 %s38, 1
        %s136 = smul.addr %s135, 2
        %s137 = scalar_lea.vmem [#allocation2], %s136
        %p138 = pneg %p51
        %p139 = pneg %p48
        %p140 = pneg %p79
        %p141 = pneg %p76
        %s142 = sand.u32 %s66, 1
        %s143 = scalar_lea.sflag [#allocation4], %s142
        %s144 = sand.u32 %s66, 1
        %s145 = smul.addr %s144, 512
        %s146 = scalar_lea.vmem [#allocation5], %s145
        %s147 = smul.u32 32, %s23
        %s148 = smul.u32 %s23, 256
        %v149 = vlaneseq
        %v150 = vshrl.u32 %v149, 7
        %v151 = vadd.s32 %v150, 8
        %v152 = vadd.s32 %v150, 16
        %v153 = vadd.s32 %v150, 24
        %v154 = vadd.s32 %v150, 32
        %v155 = vadd.s32 %v150, 40
        %v156 = vadd.s32 %v150, 48
        %v157 = vadd.s32 %v150, 56
        %v158 = vadd.s32 %v150, 64
        %v159 = vadd.s32 %v150, 72
        %v160 = vadd.s32 %v150, 80
        %v161 = vadd.s32 %v150, 88
        %v162 = vadd.s32 %v150, 96
        %v163 = vadd.s32 %v150, 104
        %v164 = vadd.s32 %v150, 112
        %v165 = vadd.s32 %v150, 120
        %v166 = vadd.s32 %v150, 128
        %v167 = vadd.s32 %v150, 136
        %v168 = vadd.s32 %v150, 144
        %v169 = vadd.s32 %v150, 152
        %v170 = vadd.s32 %v150, 160
        %v171 = vadd.s32 %v150, 168
        %v172 = vadd.s32 %v150, 176
        %v173 = vadd.s32 %v150, 184
        %v174 = vadd.s32 %v150, 192
        %v175 = vadd.s32 %v150, 200
        %v176 = vadd.s32 %v150, 208
        %v177 = vadd.s32 %v150, 216
        %v178 = vadd.s32 %v150, 224
        %v179 = vadd.s32 %v150, 232
        %v180 = vadd.s32 %v150, 240
        %v181 = vadd.s32 %v150, 248
        %v182 = vstv %s148
        %v183 = vadd.s32 %v150, %v182
        %v184 = vadd.s32 %v151, %v182
        %v185 = vadd.s32 %v152, %v182
        %v186 = vadd.s32 %v153, %v182
        %v187 = vadd.s32 %v154, %v182
        %v188 = vadd.s32 %v155, %v182
        %v189 = vadd.s32 %v156, %v182
        %v190 = vadd.s32 %v157, %v182
        %v191 = vadd.s32 %v158, %v182
        %v192 = vadd.s32 %v159, %v182
        %v193 = vadd.s32 %v160, %v182
        %v194 = vadd.s32 %v161, %v182
        %v195 = vadd.s32 %v162, %v182
        %v196 = vadd.s32 %v163, %v182
        %v197 = vadd.s32 %v164, %v182
        %v198 = vadd.s32 %v165, %v182
        %v199 = vadd.s32 %v166, %v182
        %v200 = vadd.s32 %v167, %v182
        %v201 = vadd.s32 %v168, %v182
        %v202 = vadd.s32 %v169, %v182
        %v203 = vadd.s32 %v170, %v182
        %v204 = vadd.s32 %v171, %v182
        %v205 = vadd.s32 %v172, %v182
        %v206 = vadd.s32 %v173, %v182
        %v207 = vadd.s32 %v174, %v182
        %v208 = vadd.s32 %v175, %v182
        %v209 = vadd.s32 %v176, %v182
        %v210 = vadd.s32 %v177, %v182
        %v211 = vadd.s32 %v178, %v182
        %v212 = vadd.s32 %v179, %v182
        %v213 = vadd.s32 %v180, %v182
        %v214 = vadd.s32 %v181, %v182
        %v215 = vlaneseq
        %v216 = vand.u32 %v215, 127
        %v217 = vadd.s32 %v216, 128
        %vm218 = vcmp.eq.s32.totalorder %v183, %v216
        %vm219 = vcmp.eq.s32.totalorder %v183, %v217
        %vm220 = vcmp.eq.s32.totalorder %v184, %v216
        %vm221 = vcmp.eq.s32.totalorder %v184, %v217
        %vm222 = vcmp.eq.s32.totalorder %v185, %v216
        %vm223 = vcmp.eq.s32.totalorder %v185, %v217
        %vm224 = vcmp.eq.s32.totalorder %v186, %v216
        %vm225 = vcmp.eq.s32.totalorder %v186, %v217
        %vm226 = vcmp.eq.s32.totalorder %v187, %v216
        %vm227 = vcmp.eq.s32.totalorder %v187, %v217
        %vm228 = vcmp.eq.s32.totalorder %v188, %v216
        %vm229 = vcmp.eq.s32.totalorder %v188, %v217
        %vm230 = vcmp.eq.s32.totalorder %v189, %v216
        %vm231 = vcmp.eq.s32.totalorder %v189, %v217
        %vm232 = vcmp.eq.s32.totalorder %v190, %v216
        %vm233 = vcmp.eq.s32.totalorder %v190, %v217
        %vm234 = vcmp.eq.s32.totalorder %v191, %v216
        %vm235 = vcmp.eq.s32.totalorder %v191, %v217
        %vm236 = vcmp.eq.s32.totalorder %v192, %v216
        %vm237 = vcmp.eq.s32.totalorder %v192, %v217
        %vm238 = vcmp.eq.s32.totalorder %v193, %v216
        %vm239 = vcmp.eq.s32.totalorder %v193, %v217
        %vm240 = vcmp.eq.s32.totalorder %v194, %v216
        %vm241 = vcmp.eq.s32.totalorder %v194, %v217
        %vm242 = vcmp.eq.s32.totalorder %v195, %v216
        %vm243 = vcmp.eq.s32.totalorder %v195, %v217
        %vm244 = vcmp.eq.s32.totalorder %v196, %v216
        %vm245 = vcmp.eq.s32.totalorder %v196, %v217
        %vm246 = vcmp.eq.s32.totalorder %v197, %v216
        %vm247 = vcmp.eq.s32.totalorder %v197, %v217
        %vm248 = vcmp.eq.s32.totalorder %v198, %v216
        %vm249 = vcmp.eq.s32.totalorder %v198, %v217
        %vm250 = vcmp.eq.s32.totalorder %v199, %v216
        %vm251 = vcmp.eq.s32.totalorder %v199, %v217
        %vm252 = vcmp.eq.s32.totalorder %v200, %v216
        %vm253 = vcmp.eq.s32.totalorder %v200, %v217
        %vm254 = vcmp.eq.s32.totalorder %v201, %v216
        %vm255 = vcmp.eq.s32.totalorder %v201, %v217
        %vm256 = vcmp.eq.s32.totalorder %v202, %v216
        %vm257 = vcmp.eq.s32.totalorder %v202, %v217
        %vm258 = vcmp.eq.s32.totalorder %v203, %v216
        %vm259 = vcmp.eq.s32.totalorder %v203, %v217
        %vm260 = vcmp.eq.s32.totalorder %v204, %v216
        %vm261 = vcmp.eq.s32.totalorder %v204, %v217
        %vm262 = vcmp.eq.s32.totalorder %v205, %v216
        %vm263 = vcmp.eq.s32.totalorder %v205, %v217
        %vm264 = vcmp.eq.s32.totalorder %v206, %v216
        %vm265 = vcmp.eq.s32.totalorder %v206, %v217
        %vm266 = vcmp.eq.s32.totalorder %v207, %v216
        %vm267 = vcmp.eq.s32.totalorder %v207, %v217
        %vm268 = vcmp.eq.s32.totalorder %v208, %v216
        %vm269 = vcmp.eq.s32.totalorder %v208, %v217
        %vm270 = vcmp.eq.s32.totalorder %v209, %v216
        %vm271 = vcmp.eq.s32.totalorder %v209, %v217
        %vm272 = vcmp.eq.s32.totalorder %v210, %v216
        %vm273 = vcmp.eq.s32.totalorder %v210, %v217
        %vm274 = vcmp.eq.s32.totalorder %v211, %v216
        %vm275 = vcmp.eq.s32.totalorder %v211, %v217
        %vm276 = vcmp.eq.s32.totalorder %v212, %v216
        %vm277 = vcmp.eq.s32.totalorder %v212, %v217
        %vm278 = vcmp.eq.s32.totalorder %v213, %v216
        %vm279 = vcmp.eq.s32.totalorder %v213, %v217
        %vm280 = vcmp.eq.s32.totalorder %v214, %v216
        %vm281 = vcmp.eq.s32.totalorder %v214, %v217
        %v282 = vld [vmem:[%s128] sm:$0x3]
        %v284 = vlaneseq
        %v285 = vshrl.u32 %v284, 7
        %v286 = vsub.s32 0, %v285
        %v287 = vrot.slane %v282, %v286
        %v288 = vlaneseq
        %v289 = vshrl.u32 %v288, 7
        %v290 = vsub.s32 1, %v289
        %v291 = vrot.slane %v282, %v290
        %v294 = vsel %vm218, %v287, 0.0
        %v295 = vsel %vm219, %v291, 0.0
        %v296 = vsel %vm220, %v287, 0.0
        %v297 = vsel %vm221, %v291, 0.0
        %v298 = vsel %vm222, %v287, 0.0
        %v299 = vsel %vm223, %v291, 0.0
        %v300 = vsel %vm224, %v287, 0.0
        %v301 = vsel %vm225, %v291, 0.0
        %v302 = vsel %vm226, %v287, 0.0
        %v303 = vsel %vm227, %v291, 0.0
        %v304 = vsel %vm228, %v287, 0.0
        %v305 = vsel %vm229, %v291, 0.0
        %v306 = vsel %vm230, %v287, 0.0
        %v307 = vsel %vm231, %v291, 0.0
        %v308 = vsel %vm232, %v287, 0.0
        %v309 = vsel %vm233, %v291, 0.0
        %v310 = vsel %vm234, %v287, 0.0
        %v311 = vsel %vm235, %v291, 0.0
        %v312 = vsel %vm236, %v287, 0.0
        %v313 = vsel %vm237, %v291, 0.0
        %v314 = vsel %vm238, %v287, 0.0
        %v315 = vsel %vm239, %v291, 0.0
        %v316 = vsel %vm240, %v287, 0.0
        %v317 = vsel %vm241, %v291, 0.0
        %v318 = vsel %vm242, %v287, 0.0
        %v319 = vsel %vm243, %v291, 0.0
        %v320 = vsel %vm244, %v287, 0.0
        %v321 = vsel %vm245, %v291, 0.0
        %v322 = vsel %vm246, %v287, 0.0
        %v323 = vsel %vm247, %v291, 0.0
        %v324 = vsel %vm248, %v287, 0.0
        %v325 = vsel %vm249, %v291, 0.0
        %v326 = vsel %vm250, %v287, 0.0
        %v327 = vsel %vm251, %v291, 0.0
        %v328 = vsel %vm252, %v287, 0.0
        %v329 = vsel %vm253, %v291, 0.0
        %v330 = vsel %vm254, %v287, 0.0
        %v331 = vsel %vm255, %v291, 0.0
        %v332 = vsel %vm256, %v287, 0.0
        %v333 = vsel %vm257, %v291, 0.0
        %v334 = vsel %vm258, %v287, 0.0
        %v335 = vsel %vm259, %v291, 0.0
        %v336 = vsel %vm260, %v287, 0.0
        %v337 = vsel %vm261, %v291, 0.0
        %v338 = vsel %vm262, %v287, 0.0
        %v339 = vsel %vm263, %v291, 0.0
        %v340 = vsel %vm264, %v287, 0.0
        %v341 = vsel %vm265, %v291, 0.0
        %v342 = vsel %vm266, %v287, 0.0
        %v343 = vsel %vm267, %v291, 0.0
        %v344 = vsel %vm268, %v287, 0.0
        %v345 = vsel %vm269, %v291, 0.0
        %v346 = vsel %vm270, %v287, 0.0
        %v347 = vsel %vm271, %v291, 0.0
        %v348 = vsel %vm272, %v287, 0.0
        %v349 = vsel %vm273, %v291, 0.0
        %v350 = vsel %vm274, %v287, 0.0
        %v351 = vsel %vm275, %v291, 0.0
        %v352 = vsel %vm276, %v287, 0.0
        %v353 = vsel %vm277, %v291, 0.0
        %v354 = vsel %vm278, %v287, 0.0
        %v355 = vsel %vm279, %v291, 0.0
        %v356 = vsel %vm280, %v287, 0.0
        %v357 = vsel %vm281, %v291, 0.0
        %358 = vst [vmem:[%s146] sm:$0xff] %v294
        %359 = vst [vmem:[%s146 + $0x8] sm:$0xff] %v295
        %360 = vst [vmem:[%s146 + $0x10] sm:$0xff] %v296
        %361 = vst [vmem:[%s146 + $0x18] sm:$0xff] %v297
        %362 = vst [vmem:[%s146 + $0x20] sm:$0xff] %v298
        %363 = vst [vmem:[%s146 + $0x28] sm:$0xff] %v299
        %364 = vst [vmem:[%s146 + $0x30] sm:$0xff] %v300
        %365 = vst [vmem:[%s146 + $0x38] sm:$0xff] %v301
        %366 = vst [vmem:[%s146 + $0x40] sm:$0xff] %v302
        %367 = vst [vmem:[%s146 + $0x48] sm:$0xff] %v303
        %368 = vst [vmem:[%s146 + $0x50] sm:$0xff] %v304
        %369 = vst [vmem:[%s146 + $0x58] sm:$0xff] %v305
        %370 = vst [vmem:[%s146 + $0x60] sm:$0xff] %v306
        %371 = vst [vmem:[%s146 + $0x68] sm:$0xff] %v307
        %372 = vst [vmem:[%s146 + $0x70] sm:$0xff] %v308
        %373 = vst [vmem:[%s146 + $0x78] sm:$0xff] %v309
        %374 = vst [vmem:[%s146 + $0x80] sm:$0xff] %v310
        %375 = vst [vmem:[%s146 + $0x88] sm:$0xff] %v311
        %376 = vst [vmem:[%s146 + $0x90] sm:$0xff] %v312
        %377 = vst [vmem:[%s146 + $0x98] sm:$0xff] %v313
        %378 = vst [vmem:[%s146 + $0xa0] sm:$0xff] %v314
        %379 = vst [vmem:[%s146 + $0xa8] sm:$0xff] %v315
        %380 = vst [vmem:[%s146 + $0xb0] sm:$0xff] %v316
        %381 = vst [vmem:[%s146 + $0xb8] sm:$0xff] %v317
        %382 = vst [vmem:[%s146 + $0xc0] sm:$0xff] %v318
        %383 = vst [vmem:[%s146 + $0xc8] sm:$0xff] %v319
        %384 = vst [vmem:[%s146 + $0xd0] sm:$0xff] %v320
        %385 = vst [vmem:[%s146 + $0xd8] sm:$0xff] %v321
        %386 = vst [vmem:[%s146 + $0xe0] sm:$0xff] %v322
        %387 = vst [vmem:[%s146 + $0xe8] sm:$0xff] %v323
        %388 = vst [vmem:[%s146 + $0xf0] sm:$0xff] %v324
        %389 = vst [vmem:[%s146 + $0xf8] sm:$0xff] %v325
        %390 = vst [vmem:[%s146 + $0x100] sm:$0xff] %v326
        %391 = vst [vmem:[%s146 + $0x108] sm:$0xff] %v327
        %392 = vst [vmem:[%s146 + $0x110] sm:$0xff] %v328
        %393 = vst [vmem:[%s146 + $0x118] sm:$0xff] %v329
        %394 = vst [vmem:[%s146 + $0x120] sm:$0xff] %v330
        %395 = vst [vmem:[%s146 + $0x128] sm:$0xff] %v331
        %396 = vst [vmem:[%s146 + $0x130] sm:$0xff] %v332
        %397 = vst [vmem:[%s146 + $0x138] sm:$0xff] %v333
        %398 = vst [vmem:[%s146 + $0x140] sm:$0xff] %v334
        %399 = vst [vmem:[%s146 + $0x148] sm:$0xff] %v335
        %400 = vst [vmem:[%s146 + $0x150] sm:$0xff] %v336
        %401 = vst [vmem:[%s146 + $0x158] sm:$0xff] %v337
        %402 = vst [vmem:[%s146 + $0x160] sm:$0xff] %v338
        %403 = vst [vmem:[%s146 + $0x168] sm:$0xff] %v339
        %404 = vst [vmem:[%s146 + $0x170] sm:$0xff] %v340
        %405 = vst [vmem:[%s146 + $0x178] sm:$0xff] %v341
        %406 = vst [vmem:[%s146 + $0x180] sm:$0xff] %v342
        %407 = vst [vmem:[%s146 + $0x188] sm:$0xff] %v343
        %408 = vst [vmem:[%s146 + $0x190] sm:$0xff] %v344
        %409 = vst [vmem:[%s146 + $0x198] sm:$0xff] %v345
        %410 = vst [vmem:[%s146 + $0x1a0] sm:$0xff] %v346
        %411 = vst [vmem:[%s146 + $0x1a8] sm:$0xff] %v347
        %412 = vst [vmem:[%s146 + $0x1b0] sm:$0xff] %v348
        %413 = vst [vmem:[%s146 + $0x1b8] sm:$0xff] %v349
        %414 = vst [vmem:[%s146 + $0x1c0] sm:$0xff] %v350
        %415 = vst [vmem:[%s146 + $0x1c8] sm:$0xff] %v351
        %416 = vst [vmem:[%s146 + $0x1d0] sm:$0xff] %v352
        %417 = vst [vmem:[%s146 + $0x1d8] sm:$0xff] %v353
        %418 = vst [vmem:[%s146 + $0x1e0] sm:$0xff] %v354
        %419 = vst [vmem:[%s146 + $0x1e8] sm:$0xff] %v355
        %420 = vst [vmem:[%s146 + $0x1f0] sm:$0xff] %v356
        %421 = vst [vmem:[%s146 + $0x1f8] sm:$0xff] %v357
        %s422 = sand.u32 %s66, 1
        %s423 = scalar_lea.sflag [#allocation4], %s422
        %s424 = sand.u32 %s66, 1
        %s425 = smul.addr %s424, 512
        %s426 = scalar_lea.vmem [#allocation5], %s425
        // Predicated region
        $region29: #{tpu_custom_call.1} parent=23 // pred_check
          %p427 = pneg %p76
        $region30: #{tpu_custom_call.1} parent=23 // pred_check_branch
          %429 = sbr.rel (%p427) target = $region32
        $region31: #{tpu_custom_call.1} parent=23 // pred_region
          %s430 = smul.u32 32, %s23
          %s432 = ssub.s32 8192, 8192
          %433 = vsyncadd %s423, %s432
          %s434 = smul.addr %s430, 2
          %s435 = smul.addr %s22, 64
          %s436 = sadd.s32 %s434, %s435
          %s437 = smul.addr %s436, 128
          %s438 = scalar_lea.hbm %s1, %s437
          %s439 = sshll.u32 %s426, 4
          %s440 = int_to_ptr.vmem [resolvable:$true] %s439
          %445 = dma.vmem_to_hbm [thread:$0]  %s440, 8192, %s438, %s423, 256, 256, 16
        $region32: #{tpu_custom_call.1} parent=23 // pred_fallthru
          _
      $region24: #{tpu_custom_call.1} parent=5 // pred_fallthru
        _
      %p446 = scmp.le.s32.totalorder 2, %s13
      // Predicated region
      $region33: #{tpu_custom_call.1} parent=5 // pred_check
        %p447 = pneg %p446
      $region34: #{tpu_custom_call.1} parent=5 // pred_check_branch
        %449 = sbr.rel (%p447) target = $region36
      $region35: #{tpu_custom_call.1} parent=5 // pred_region
        %s450 = ssub.s32 %s13, 2
        // Predicated region
        $region37: #{tpu_custom_call.1} parent=35 // pred_check
          %p451 = pneg %p82
        $region38: #{tpu_custom_call.1} parent=35 // pred_check_branch
          %453 = sbr.rel (%p451) target = $region40
        $region39: #{tpu_custom_call.1} parent=35 // pred_region
          %s454 = sand.u32 %s67, 1
          %s455 = scalar_lea.sflag [#allocation4], %s454
          %s456 = sand.u32 %s67, 1
          %s457 = smul.addr %s456, 512
          %s458 = scalar_lea.vmem [#allocation5], %s457
          %459 = dma.done %s455, 8192
        $region40: #{tpu_custom_call.1} parent=35 // pred_fallthru
          _
      $region36: #{tpu_custom_call.1} parent=5 // pred_fallthru
        _
    $region6: #{tpu_custom_call.1} parent=1 // loop_footer
      %s17 = sadd.s32 1, %s13
    $region7: #{tpu_custom_call.1} parent=1 // loop_footer_branch
      %12 = sbr.rel target = $region3
    $region8: #{tpu_custom_call.1} parent=1 // loop_exit
      _
    %460 = vsyncpa [#allocation3], 1
    %s461 = scalar_lea.sflag [#allocation3], 1
    %462 = vsyncpa %s461, 1
    %463 = vsyncpa [#allocation4], 1
    %s464 = scalar_lea.sflag [#allocation4], 1
    %465 = vsyncpa %s464, 1

</llo_original>
